<compile_context>
chip_gen: v7x
topology: tpu7x:2x2x1
jax: 0.10.0
libtpu: 0.0.40
codegen_flags: <defaults>
</compile_context>

<pallas_src>
import math

import jax
import jax.numpy as jnp
import numpy as np
from jax.experimental import pallas as pl
from jax.experimental.pallas import tpu as pltpu


# ----------------------------------------------------------------------------
# tile pickers (respect the (8, 128) block constraints / divisibility)
# ----------------------------------------------------------------------------
def _pick_tile(full, target, align):
    """Largest multiple of `align` <= target that divides `full`, else `full`."""
    if full <= target:
        return full
    t = (min(target, full) // align) * align
    while t >= align:
        if full % t == 0:
            return t
        t -= align
    return full


def _pick_head_block(n_heads, dph):
    """Largest divisor of n_heads with roughly <= 256 lanes worth of dph work."""
    want = max(1, 256 // max(dph, 1))
    hb = 1
    for d in range(1, n_heads + 1):
        if n_heads % d == 0 and d <= want:
            hb = d
    return hb


# ----------------------------------------------------------------------------
# Tiled linear: y = x @ W + b   (W stored as (in, out) == torch weight.T)
# ----------------------------------------------------------------------------
def _linear_kernel(x_ref, w_ref, b_ref, o_ref, acc_ref):
    k = pl.program_id(2)

    @pl.when(k == 0)
    def _():
        acc_ref[...] = jnp.zeros_like(acc_ref)

    acc_ref[...] += jnp.dot(
        x_ref[...], w_ref[...], preferred_element_type=jnp.float32
    )

    @pl.when(k == pl.num_programs(2) - 1)
    def _():
        o_ref[...] = (acc_ref[...] + b_ref[...]).astype(o_ref.dtype)


def pallas_linear(x, w, b, *, tm=256, tn=256, tk=512):
    M, K = x.shape
    N = w.shape[1]
    tm = _pick_tile(M, tm, 8)
    tn = _pick_tile(N, tn, 128)
    tk = _pick_tile(K, tk, 128)
    b2 = b.reshape(1, N).astype(jnp.float32)

    return pl.pallas_call(
        _linear_kernel,
        out_shape=jax.ShapeDtypeStruct((M, N), x.dtype),
        grid=(M // tm, N // tn, K // tk),
        in_specs=[
            pl.BlockSpec((tm, tk), lambda i, j, k: (i, k)),
            pl.BlockSpec((tk, tn), lambda i, j, k: (k, j)),
            pl.BlockSpec((1, tn), lambda i, j, k: (0, j)),
        ],
        out_specs=pl.BlockSpec((tm, tn), lambda i, j, k: (i, j)),
        scratch_shapes=[pltpu.VMEM((tm, tn), jnp.float32)],
        compiler_params=pltpu.CompilerParams(
            dimension_semantics=("parallel", "parallel", "arbitrary")
        ),
    )(x, w, b2)


# ----------------------------------------------------------------------------
# Flash-style attention core: grid (bs, n_heads/HB, qlen/tq, klen/tk)
#   scores = (q / sqrt(dph)) @ k^T + mask_bias ; online softmax (f32) ; @ v
# ----------------------------------------------------------------------------
def _make_flash_kernel(dim_per_head):
    inv_scale = 1.0 / math.sqrt(dim_per_head)

    def kernel(q_ref, k_ref, v_ref, bias_ref, o_ref, m_sc, l_sc, acc_sc):
        ki = pl.program_id(3)

        @pl.when(ki == 0)
        def _():
            m_sc[...] = jnp.full_like(m_sc, -1e30)
            l_sc[...] = jnp.zeros_like(l_sc)
            acc_sc[...] = jnp.zeros_like(acc_sc)

        q = q_ref[0] * inv_scale          # (HB, tq, dph), input dtype
        k = k_ref[0]                      # (HB, tk, dph)
        v = v_ref[0]                      # (HB, tk, dph)

        # (HB, tq, tk) f32 on the MXU; contraction expressed directly (no k.T).
        s = jnp.einsum("hqd,hkd->hqk", q, k, preferred_element_type=jnp.float32)
        s = s + bias_ref[...]             # additive mask bias, broadcasts (1,1,tk)

        m_prev = m_sc[...]
        m_new = jnp.maximum(m_prev, jnp.max(s, axis=-1, keepdims=True))
        alpha = jnp.exp(m_prev - m_new)
        p = jnp.exp(s - m_new)
        l_sc[...] = alpha * l_sc[...] + jnp.sum(p, axis=-1, keepdims=True)
        acc_sc[...] = alpha * acc_sc[...] + jnp.einsum(
            "hqk,hkd->hqd", p.astype(v.dtype), v, preferred_element_type=jnp.float32
        )
        m_sc[...] = m_new

        @pl.when(ki == pl.num_programs(3) - 1)
        def _():
            inv_l = pl.reciprocal(l_sc[...], approx=False)
            o_ref[0] = (acc_sc[...] * inv_l).astype(o_ref.dtype)

    return kernel


def pallas_flash_attention(q, k, v, mask_bias, *, tq=128, tk=512):
    """q/k/v: (bs, n_heads, seq, dph); mask_bias: (bs, 1, klen) additive f32."""
    bs, n_heads, qlen, dph = q.shape
    klen = k.shape[2]
    hb = _pick_head_block(n_heads, dph)
    tq = _pick_tile(qlen, tq, 8)
    tk = _pick_tile(klen, tk, 128)   # 128-aligned so the (1,1,tk) mask block is legal

    kernel = _make_flash_kernel(dph)
    return pl.pallas_call(
        kernel,
        out_shape=jax.ShapeDtypeStruct((bs, n_heads, qlen, dph), q.dtype),
        grid=(bs, n_heads // hb, qlen // tq, klen // tk),
        in_specs=[
            pl.BlockSpec((1, hb, tq, dph), lambda b, h, qi, ki: (b, h, qi, 0)),
            pl.BlockSpec((1, hb, tk, dph), lambda b, h, qi, ki: (b, h, ki, 0)),
            pl.BlockSpec((1, hb, tk, dph), lambda b, h, qi, ki: (b, h, ki, 0)),
            pl.BlockSpec((1, 1, tk), lambda b, h, qi, ki: (b, 0, ki)),
        ],
        out_specs=pl.BlockSpec((1, hb, tq, dph), lambda b, h, qi, ki: (b, h, qi, 0)),
        scratch_shapes=[
            pltpu.VMEM((hb, tq, 1), jnp.float32),    # running max
            pltpu.VMEM((hb, tq, 1), jnp.float32),    # running sum
            pltpu.VMEM((hb, tq, dph), jnp.float32),  # output accumulator
        ],
        compiler_params=pltpu.CompilerParams(
            dimension_semantics=("parallel", "parallel", "parallel", "arbitrary")
        ),
    )(q, k, v, mask_bias)


# ----------------------------------------------------------------------------
# Full module forward (self-attention path; kv=None, no cache, dropout=0)
# ----------------------------------------------------------------------------
# TODO(synk): encoder-attention / incremental-decoding cache paths (kv, use_cache)
# are stateful control flow and are not implemented in this synthetic kernel.
def multi_head_attention(x, mask, params, n_heads):
    bs, qlen, dim = x.shape
    dph = dim // n_heads
    klen = qlen  # self-attention, no cache

    # Fused QKV projection: one GEMM over (dim, 3*dim).
    # (In a real model the fused weight/bias would be stored pre-concatenated.)
    qkv_w = jnp.concatenate([params["q_w"], params["k_w"], params["v_w"]], axis=1)
    qkv_b = jnp.concatenate([params["q_b"], params["k_b"], params["v_b"]], axis=0)
    x2 = x.reshape(bs * qlen, dim)
    qkv = pallas_linear(x2, qkv_w, qkv_b)                       # (bs*qlen, 3*dim)

    # Split heads with a single transpose of the fused tensor.
    qkv = qkv.reshape(bs, qlen, 3, n_heads, dph).transpose(2, 0, 3, 1, 4)
    qh, kh, vh = qkv[0], qkv[1], qkv[2]                         # (bs, n_heads, qlen, dph)

    # mask (bs, klen): 1 = keep, 0 = masked -> additive bias (no per-head repeat,
    # no -inf so fully-masked rows cannot NaN).
    mask_bias = ((mask.astype(jnp.float32) - 1.0) * 1e9).reshape(bs, 1, klen)

    ctx = pallas_flash_attention(qh, kh, vh, mask_bias)         # (bs, n_heads, qlen, dph)

    ctx = ctx.transpose(0, 2, 1, 3).reshape(bs * qlen, dim)
    out = pallas_linear(ctx, params["o_w"], params["o_b"])
    return out.reshape(bs, qlen, dim)


# ----------------------------------------------------------------------------
# Pure-JAX reference (mirrors the PyTorch forward) for a correctness check
# ----------------------------------------------------------------------------
def reference_mha(x, mask, params, n_heads):
    bs, qlen, dim = x.shape
    dph = dim // n_heads

    def lin(t, w, b):
        return t @ w + b

    def shp(t):
        return t.reshape(bs, qlen, n_heads, dph).transpose(0, 2, 1, 3)

    q = shp(lin(x, params["q_w"], params["q_b"])) / math.sqrt(dph)
    k = shp(lin(x, params["k_w"], params["k_b"]))
    v = shp(lin(x, params["v_w"], params["v_b"]))
    scores = jnp.einsum("bhqd,bhkd->bhqk", q, k)
    m = (mask == 0).reshape(bs, 1, 1, qlen)
    scores = jnp.where(m, -jnp.inf, scores)
    weights = jax.nn.softmax(scores.astype(jnp.float32), axis=-1).astype(scores.dtype)
    ctx = jnp.einsum("bhqk,bhkd->bhqd", weights, v)
    ctx = ctx.transpose(0, 2, 1, 3).reshape(bs, qlen, dim)
    return lin(ctx, params["o_w"], params["o_b"])


# ----------------------------------------------------------------------------
# Deterministic parameter init (nn.Linear-style uniform(-1/sqrt(fan_in), ...))
# ----------------------------------------------------------------------------
def init_params(key, dim, dim_encoder):
    def linear_params(k, fan_in, fan_out):
        k1, k2 = jax.random.split(k)
        bound = 1.0 / math.sqrt(fan_in)
        w = jax.random.uniform(k1, (fan_in, fan_out), jnp.float32, -bound, bound)
        b = jax.random.uniform(k2, (fan_out,), jnp.float32, -bound, bound)
        return w, b

    kq, kk, kv, ko = jax.random.split(key, 4)
    q_w, q_b = linear_params(kq, dim, dim)
    k_w, k_b = linear_params(kk, dim_encoder, dim)
    v_w, v_b = linear_params(kv, dim_encoder, dim)
    o_w, o_b = linear_params(ko, dim, dim)
    return dict(
        q_w=q_w, q_b=q_b, k_w=k_w, k_b=k_b, v_w=v_w, v_b=v_b, o_w=o_w, o_b=o_b
    )


if __name__ == "__main__":
    bs, qlen, dim, n_heads = 2, 16, 32, 4

    key = jax.random.PRNGKey(0)
    k_x, k_p = jax.random.split(key)
    x = jax.random.normal(k_x, (bs, qlen, dim), jnp.float32)

    # mask: (bs, klen), 1 = attend, 0 = masked. Mask the last 3 keys of batch 1.
    mask = np.ones((bs, qlen), dtype=np.float32)
    mask[1, -3:] = 0.0
    mask = jnp.asarray(mask)

    params = init_params(k_p, dim, dim)

    out = jax.block_until_ready(multi_head_attention(x, mask, params, n_heads))

    ref = reference_mha(x, mask, params, n_heads)
    np.testing.assert_allclose(np.asarray(out), np.asarray(ref), rtol=1e-5, atol=1e-5)

    print("KERNEL_OK")
</pallas_src>

<mosaic_0001>
module attributes {stable_mosaic.version = 11 : i64} {
  func.func @_linear_kernel(%arg0: i32, %arg1: i32, %arg2: i32, %arg3: memref<32x32xf32, #tpu.memory_space<vmem>>, %arg4: memref<32x96xf32, #tpu.memory_space<vmem>>, %arg5: memref<1x96xf32, #tpu.memory_space<vmem>>, %arg6: memref<32x96xf32, #tpu.memory_space<vmem>>, %arg7: memref<32x96xf32, #tpu.memory_space<vmem>>) attributes {dimension_semantics = [#tpu.dimension_semantics<parallel>, #tpu.dimension_semantics<parallel>, #tpu.dimension_semantics<arbitrary>], iteration_bounds = array<i64: 1, 1, 1>, scalar_prefetch = 0 : i64, scratch_operands = 1 : i64, tpu.core_type = #tpu.core_type<tc>, window_params = [{transform_indices = @transform_0, window_bounds = array<i64: 32, 32>}, {transform_indices = @transform_1, window_bounds = array<i64: 32, 96>}, {transform_indices = @transform_2, window_bounds = array<i64: 1, 96>}, {transform_indices = @transform_3, window_bounds = array<i64: 32, 96>}]} {
    %c0_i32 = arith.constant 0 : i32
    %0 = arith.cmpi eq, %arg2, %c0_i32 : i32
    %1 = arith.extui %0 : i1 to i32
    %c0_i32_0 = arith.constant 0 : i32
    %2 = arith.cmpi ne, %1, %c0_i32_0 : i32
    scf.if %2 {
      %cst_10 = arith.constant 0.000000e+00 : f32
      %12 = vector.broadcast %cst_10 : f32 to vector<32x96xf32>
      %c0_11 = arith.constant 0 : index
      %c0_12 = arith.constant 0 : index
      %13 = vector.load %arg7[%c0_11, %c0_12] : memref<32x96xf32, #tpu.memory_space<vmem>>, vector<32x96xf32>
      tpu.vector_store %arg7[%c0_11, %c0_12], %12 {strides = array<i32>} : memref<32x96xf32, #tpu.memory_space<vmem>>, vector<32x96xf32>,
    } else {
    }
    %c0 = arith.constant 0 : index
    %c0_1 = arith.constant 0 : index
    %3 = vector.load %arg7[%c0, %c0_1] : memref<32x96xf32, #tpu.memory_space<vmem>>, vector<32x96xf32>
    %c0_2 = arith.constant 0 : index
    %c0_3 = arith.constant 0 : index
    %4 = vector.load %arg3[%c0_2, %c0_3] : memref<32x32xf32, #tpu.memory_space<vmem>>, vector<32x32xf32>
    %c0_4 = arith.constant 0 : index
    %c0_5 = arith.constant 0 : index
    %5 = vector.load %arg4[%c0_4, %c0_5] : memref<32x96xf32, #tpu.memory_space<vmem>>, vector<32x96xf32>
    %cst = arith.constant dense<0.000000e+00> : vector<32x96xf32>
    %6 = tpu.matmul %4, %5, %cst {dimension_numbers = #tpu.dot_dimension_numbers<[1], [0], [0], [1], [0, 0, 1, 1], [], []>} : vector<32x32xf32>, vector<32x96xf32>, vector<32x96xf32> -> vector<32x96xf32>
    %7 = arith.addf %3, %6 : vector<32x96xf32>
    %c0_6 = arith.constant 0 : index
    %c0_7 = arith.constant 0 : index
    %8 = vector.load %arg7[%c0_6, %c0_7] : memref<32x96xf32, #tpu.memory_space<vmem>>, vector<32x96xf32>
    tpu.vector_store %arg7[%c0_6, %c0_7], %7 {strides = array<i32>} : memref<32x96xf32, #tpu.memory_space<vmem>>, vector<32x96xf32>,
    %c0_i32_8 = arith.constant 0 : i32
    %9 = arith.cmpi eq, %arg2, %c0_i32_8 : i32
    %10 = arith.extui %9 : i1 to i32
    %c0_i32_9 = arith.constant 0 : i32
    %11 = arith.cmpi ne, %10, %c0_i32_9 : i32
    scf.if %11 {
      %c0_10 = arith.constant 0 : index
      %c0_11 = arith.constant 0 : index
      %12 = vector.load %arg7[%c0_10, %c0_11] : memref<32x96xf32, #tpu.memory_space<vmem>>, vector<32x96xf32>
      %c0_12 = arith.constant 0 : index
      %c0_13 = arith.constant 0 : index
      %13 = vector.load %arg5[%c0_12, %c0_13] : memref<1x96xf32, #tpu.memory_space<vmem>>, vector<1x96xf32>
      %14 = vector.broadcast %13 : vector<1x96xf32> to vector<32x96xf32>
      %15 = arith.addf %12, %14 : vector<32x96xf32>
      %c0_14 = arith.constant 0 : index
      %c0_15 = arith.constant 0 : index
      %16 = vector.load %arg6[%c0_14, %c0_15] : memref<32x96xf32, #tpu.memory_space<vmem>>, vector<32x96xf32>
      tpu.vector_store %arg6[%c0_14, %c0_15], %15 {strides = array<i32>} : memref<32x96xf32, #tpu.memory_space<vmem>>, vector<32x96xf32>,
    } else {
    }
    return
  }
  func.func @transform_0(%arg0: i32, %arg1: i32, %arg2: i32) -> (i32, i32) {
    %c0_i32 = arith.constant 0 : i32
    return %arg0, %arg2 : i32, i32
  }
  func.func @transform_1(%arg0: i32, %arg1: i32, %arg2: i32) -> (i32, i32) {
    %c0_i32 = arith.constant 0 : i32
    return %arg2, %arg1 : i32, i32
  }
  func.func @transform_2(%arg0: i32, %arg1: i32, %arg2: i32) -> (i32, i32) {
    %c0_i32 = arith.constant 0 : i32
    %c0_i32_0 = arith.constant 0 : i32
    return %c0_i32, %arg1 : i32, i32
  }
  func.func @transform_3(%arg0: i32, %arg1: i32, %arg2: i32) -> (i32, i32) {
    %c0_i32 = arith.constant 0 : i32
    return %arg0, %arg1 : i32, i32
  }
}

</mosaic_0001>

<llo_original>
// kernel: tpu_custom_call.1
$region0: #{tpu_custom_call.1}
  #allocation0 [shape = 'u32[]', space=smem, size = 0x4, offset = 0x4, fixed_abs, tag = 'smem constant byte address 0x4 - core index']
  #allocation1 [shape = 'u32[144,128]{1,0:T(1,128)}', space=vmem, size = 0x12000, scoped, tag = 'internal scratch']
  #allocation2 [shape = 'f32[32,96]{1,0:T(8,128)}', space=vmem, size = 0x4000, scoped, tag = 'scratch operand']
  %s0 = inlined_call_operand.hbm [shape: f32[32,32], index: 0, kind: input, shape index: {}]
  %s1 = inlined_call_operand.hbm [shape: f32[32,96], index: 1, kind: input, shape index: {}]
  %s2 = inlined_call_operand.vmem [shape: f32[1,96], index: 2, kind: input, shape index: {}]
  %s3 = inlined_call_operand.hbm [shape: f32[32,96], index: 3, kind: output, shape index: {}]
  %s4 = sld [smem:[#allocation0]]
  $region38: #{tpu_custom_call.1} parent=0
    _
  %s6 = ssub.s32 1, %s4
  %s7 = scalar_select 0, %s6, %s4
  $region1: #{tpu_custom_call.1} parent=0
    #allocation3 [shape = 'u8[16384]{0}', space=vmem, size = 0x4000, scoped, tag = 'input window, operand 0, single buffered']
    #allocation4 [shape = 's32[1]{0}', space=sflag, size = 0x4, scoped, tag = 'scoped memory for tpu_custom_call.1']
    #allocation5 [shape = 's32[1]{0}', space=sflag, size = 0x4, scoped, tag = 'scoped memory for tpu_custom_call.1']
    #allocation6 [shape = 'u8[16384]{0}', space=vmem, size = 0x4000, scoped, tag = 'input window, operand 1, single buffered']
    #allocation7 [shape = 's32[1]{0}', space=sflag, size = 0x4, scoped, tag = 'scoped memory for tpu_custom_call.1']
    #allocation8 [shape = 'u8[16384]{0}', space=vmem, size = 0x4000, scoped, tag = 'output window, operand 0, single buffered']
    %8 = vsyncpa [#allocation4], 0
    %9 = vsyncpa [#allocation7], 0
    %10 = vsyncpa [#allocation5], 0
    // Predicated region
    $region2: #{tpu_custom_call.1} parent=1 // pred_check
      _
    $region3: #{tpu_custom_call.1} parent=1 // pred_check_branch
      %12 = sbr.rel (0) target = $region5
    $region4: #{tpu_custom_call.1} parent=1 // pred_region
      %s14 = ssub.s32 512, 512
      %15 = vsyncadd [#allocation4], %s14
      %s16 = sshll.u32 [#allocation3], 4
      %s17 = int_to_ptr.vmem [resolvable:$true] %s16
      %22 = dma.hbm_to_vmem [thread:$0]  %s0, 512, %s17, [#allocation4], 128, 128, 8
    $region5: #{tpu_custom_call.1} parent=1 // pred_fallthru
      _
    // Predicated region
    $region6: #{tpu_custom_call.1} parent=1 // pred_check
      _
    $region7: #{tpu_custom_call.1} parent=1 // pred_check_branch
      %24 = sbr.rel (0) target = $region9
    $region8: #{tpu_custom_call.1} parent=1 // pred_region
      %s26 = ssub.s32 512, 512
      %27 = vsyncadd [#allocation7], %s26
      %s28 = sshll.u32 [#allocation6], 4
      %s29 = int_to_ptr.vmem [resolvable:$true] %s28
      %34 = dma.hbm_to_vmem [thread:$0]  %s1, 512, %s29, [#allocation7], 128, 128, 8
    $region9: #{tpu_custom_call.1} parent=1 // pred_fallthru
      _
    // Predicated region
    $region10: #{tpu_custom_call.1} parent=1 // pred_check
      _
    $region11: #{tpu_custom_call.1} parent=1 // pred_check_branch
      %36 = sbr.rel (0) target = $region13
    $region12: #{tpu_custom_call.1} parent=1 // pred_region
      _
    $region13: #{tpu_custom_call.1} parent=1 // pred_fallthru
      _
    // Predicated region
    $region14: #{tpu_custom_call.1} parent=1 // pred_check
      _
    $region15: #{tpu_custom_call.1} parent=1 // pred_check_branch
      %38 = sbr.rel (0) target = $region17
    $region16: #{tpu_custom_call.1} parent=1 // pred_region
      %39 = dma.done [#allocation4], 512
    $region17: #{tpu_custom_call.1} parent=1 // pred_fallthru
      _
    // Predicated region
    $region18: #{tpu_custom_call.1} parent=1 // pred_check
      _
    $region19: #{tpu_custom_call.1} parent=1 // pred_check_branch
      %41 = sbr.rel (0) target = $region21
    $region20: #{tpu_custom_call.1} parent=1 // pred_region
      %42 = dma.done [#allocation7], 512
    $region21: #{tpu_custom_call.1} parent=1 // pred_fallthru
      _
    %p43 = scmp.eq.s32.totalorder 0, 0
    // Predicated region
    $region22: #{tpu_custom_call.1} parent=1 // pred_check
      %p44 = pneg %p43
    $region23: #{tpu_custom_call.1} parent=1 // pred_check_branch
      %46 = sbr.rel (%p44) target = $region25
    $region24: #{tpu_custom_call.1} parent=1 // pred_region
      %vm47 = vcmask 785408
      %48 = vst.msk [vmem:[#allocation2] sm:$0xff] %vm47, 0.0
      %49 = vst.msk [vmem:[#allocation2 + $0x8] sm:$0xff] %vm47, 0.0
      %50 = vst.msk [vmem:[#allocation2 + $0x10] sm:$0xff] %vm47, 0.0
      %51 = vst.msk [vmem:[#allocation2 + $0x18] sm:$0xff] %vm47, 0.0
    $region25: #{tpu_custom_call.1} parent=1 // pred_fallthru
      _
    %v52 = vld [vmem:[#allocation2] sm:$0xff]
    %v53 = vld [vmem:[#allocation2 + $0x8] sm:$0xff]
    %v54 = vld [vmem:[#allocation2 + $0x10] sm:$0xff]
    %v55 = vld [vmem:[#allocation2 + $0x18] sm:$0xff]
    %v56 = vld [vmem:[#allocation3] sm:$0xff]
    %v57 = vld [vmem:[#allocation3 + $0x8] sm:$0xff]
    %v58 = vld [vmem:[#allocation3 + $0x10] sm:$0xff]
    %v59 = vld [vmem:[#allocation3 + $0x18] sm:$0xff]
    %v60 = vld [vmem:[#allocation6] sm:$0xff]
    %v61 = vld [vmem:[#allocation6 + $0x8] sm:$0xff]
    %v62 = vld [vmem:[#allocation6 + $0x10] sm:$0xff]
    %v63 = vld [vmem:[#allocation6 + $0x18] sm:$0xff]
    %vm64 = vcmask 261120
    %v66 = vsel %vm64, %v56, 0
    %v69 = vsel %vm64, %v57, 0
    %v72 = vsel %vm64, %v58, 0
    %v75 = vsel %vm64, %v59, 0
    %77 = vmatprep.subr.mxu0 0.0
    %78 = vmatpush1.msra.mxu0 %v60
    %79 = vmatprep.subr.mxu0 0.0
    %80 = vmatpush1.msra.mxu0 %v61
    %81 = vmatprep.subr.mxu0 0.0
    %82 = vmatpush1.msra.mxu0 %v62
    %83 = vmatprep.subr.mxu0 0.0
    %84 = vmatpush1.msra.mxu0 %v63
    %85 = vmatprep.subr.mxu0 0.0
    %86 = vmatpush1.msra.mxu0 0.0
    %87 = vmatprep.subr.mxu0 0.0
    %88 = vmatpush1.msra.mxu0 0.0
    %89 = vmatprep.subr.mxu0 0.0
    %90 = vmatpush1.msra.mxu0 0.0
    %91 = vmatprep.subr.mxu0 0.0
    %92 = vmatpush1.msra.mxu0 0.0
    %93 = vmatprep.subr.mxu0 0.0
    %94 = vmatpush1.msra.mxu0 0.0
    %95 = vmatprep.subr.mxu0 0.0
    %96 = vmatpush1.msra.mxu0 0.0
    %97 = vmatprep.subr.mxu0 0.0
    %98 = vmatpush1.msra.mxu0 0.0
    %99 = vmatprep.subr.mxu0 0.0
    %100 = vmatpush1.msra.mxu0 0.0
    %101 = vmatprep.subr.mxu0 0.0
    %102 = vmatpush1.msra.mxu0 0.0
    %103 = vmatprep.subr.mxu0 0.0
    %104 = vmatpush1.msra.mxu0 0.0
    %105 = vmatprep.subr.mxu0 0.0
    %106 = vmatpush1.msra.mxu0 0.0
    %107 = vmatprep.subr.mxu0 0.0
    %108 = vmatpush1.msra.mxu0 0.0
    %109 = vmatprep.subr.mxu0 0.0
    %110 = vmatpush1.msra.mxu0 0.0
    %111 = vmatprep.subr.mxu0 0.0
    %112 = vmatpush1.msra.mxu0 0.0
    %113 = vmatprep.subr.mxu0 0.0
    %114 = vmatpush1.msra.mxu0 0.0
    %115 = vmatprep.subr.mxu0 0.0
    %116 = vmatpush1.msra.mxu0 0.0
    %117 = vmatprep.subr.mxu0 0.0
    %118 = vmatpush1.msra.mxu0 0.0
    %119 = vmatprep.subr.mxu0 0.0
    %120 = vmatpush1.msra.mxu0 0.0
    %121 = vmatprep.subr.mxu0 0.0
    %122 = vmatpush1.msra.mxu0 0.0
    %123 = vmatprep.subr.mxu0 0.0
    %124 = vmatpush1.msra.mxu0 0.0
    %125 = vmatprep.subr.mxu0 0.0
    %126 = vmatpush1.msra.mxu0 0.0
    %127 = vmatprep.subr.mxu0 0.0
    %128 = vmatpush1.msra.mxu0 0.0
    %129 = vmatprep.subr.mxu0 0.0
    %130 = vmatpush1.msra.mxu0 0.0
    %131 = vmatprep.subr.mxu0 0.0
    %132 = vmatpush1.msra.mxu0 0.0
    %133 = vmatprep.subr.mxu0 0.0
    %134 = vmatpush1.msra.mxu0 0.0
    %135 = vmatprep.subr.mxu0 0.0
    %136 = vmatpush1.msra.mxu0 0.0
    %137 = vmatprep.subr.mxu0 0.0
    %138 = vmatpush1.msra.mxu0 0.0
    %139 = vmatprep.subr.mxu0 0.0
    %140 = vmatpush1.msra.mxu0 0.0
    %141 = vmatprep.mubr.f32.mxu0 0.0
    %142 = vmatmul.mubr.f32.gmra.mrb[0].mxu0 %v66
    %v143 = vpop.f32.mrb[0].mxu0
    %v144 = vadd.f32 0.0, %v143
    %v145 = vpop.f32.mrb[0].mxu0
    %146 = vmatprep.mubr.f32.mxu0 0.0
    %147 = vmatmul.mubr.f32.gmra.mrb[0].mxu0 %v69
    %v148 = vpop.f32.mrb[0].mxu0
    %v149 = vadd.f32 0.0, %v148
    %v150 = vpop.f32.mrb[0].mxu0
    %151 = vmatprep.mubr.f32.mxu0 0.0
    %152 = vmatmul.mubr.f32.gmra.mrb[0].mxu0 %v72
    %v153 = vpop.f32.mrb[0].mxu0
    %v154 = vadd.f32 0.0, %v153
    %v155 = vpop.f32.mrb[0].mxu0
    %156 = vmatprep.mubr.f32.mxu0 0.0
    %157 = vmatmul.mubr.f32.gmra.mrb[0].mxu0 %v75
    %v158 = vpop.f32.mrb[0].mxu0
    %v159 = vadd.f32 0.0, %v158
    %v160 = vpop.f32.mrb[0].mxu0
    %161 = vdwg.mxu0
    %v162 = vadd.f32 %v52, %v144
    %v163 = vadd.f32 %v53, %v149
    %v164 = vadd.f32 %v54, %v154
    %v165 = vadd.f32 %v55, %v159
    %vm166 = vcmask 785408
    %167 = vst.msk [vmem:[#allocation2] sm:$0xff] %vm166, %v162
    %168 = vst.msk [vmem:[#allocation2 + $0x8] sm:$0xff] %vm166, %v163
    %169 = vst.msk [vmem:[#allocation2 + $0x10] sm:$0xff] %vm166, %v164
    %170 = vst.msk [vmem:[#allocation2 + $0x18] sm:$0xff] %vm166, %v165
    // Predicated region
    $region26: #{tpu_custom_call.1} parent=1 // pred_check
      %p171 = pneg %p43
    $region27: #{tpu_custom_call.1} parent=1 // pred_check_branch
      %173 = sbr.rel (%p171) target = $region29
    $region28: #{tpu_custom_call.1} parent=1 // pred_region
      %v174 = vld [vmem:[#allocation2] sm:$0xff]
      %v175 = vld [vmem:[#allocation2 + $0x8] sm:$0xff]
      %v176 = vld [vmem:[#allocation2 + $0x10] sm:$0xff]
      %v177 = vld [vmem:[#allocation2 + $0x18] sm:$0xff]
      %v178 = vld [vmem:[%s2] sm:$0x1]
      %v180 = vlaneseq
      %v181 = vshrl.u32 %v180, 7
      %v182 = vsub.s32 0, %v181
      %v183 = vrot.slane %v178, %v182
      %v185 = vadd.f32 %v174, %v183
      %v186 = vadd.f32 %v175, %v183
      %v187 = vadd.f32 %v176, %v183
      %v188 = vadd.f32 %v177, %v183
      %189 = vst.msk [vmem:[#allocation8] sm:$0xff] %vm166, %v185
      %190 = vst.msk [vmem:[#allocation8 + $0x8] sm:$0xff] %vm166, %v186
      %191 = vst.msk [vmem:[#allocation8 + $0x10] sm:$0xff] %vm166, %v187
      %192 = vst.msk [vmem:[#allocation8 + $0x18] sm:$0xff] %vm166, %v188
    $region29: #{tpu_custom_call.1} parent=1 // pred_fallthru
      _
    // Predicated region
    $region30: #{tpu_custom_call.1} parent=1 // pred_check
      _
    $region31: #{tpu_custom_call.1} parent=1 // pred_check_branch
      %194 = sbr.rel (0) target = $region33
    $region32: #{tpu_custom_call.1} parent=1 // pred_region
      %s196 = ssub.s32 512, 512
      %197 = vsyncadd [#allocation5], %s196
      %s198 = sshll.u32 [#allocation8], 4
      %s199 = int_to_ptr.vmem [resolvable:$true] %s198
      %204 = dma.vmem_to_hbm [thread:$0]  %s199, 512, %s3, [#allocation5], 128, 128, 8
    $region33: #{tpu_custom_call.1} parent=1 // pred_fallthru
      _
    // Predicated region
    $region34: #{tpu_custom_call.1} parent=1 // pred_check
      _
    $region35: #{tpu_custom_call.1} parent=1 // pred_check_branch
      %206 = sbr.rel (0) target = $region37
    $region36: #{tpu_custom_call.1} parent=1 // pred_region
      %207 = dma.done [#allocation5], 512
    $region37: #{tpu_custom_call.1} parent=1 // pred_fallthru
      _
    %208 = vsyncpa [#allocation4], 1
    %209 = vsyncpa [#allocation7], 1
    %210 = vsyncpa [#allocation5], 1

</llo_original>
